<compile_context>
chip_gen: v7x
topology: tpu7x:2x2x1
jax: 0.10.0
libtpu: 0.0.40
codegen_flags: <defaults>
</compile_context>

<pallas_src>
import functools

import jax
import jax.numpy as jnp
import numpy as np
from jax import lax
from jax.experimental import pallas as pl
from jax.experimental.pallas import tpu as pltpu

# Attention tiles.  Raise these for big proteins (e.g. 256 target rows x 512
# source lanes on v6e's 128 MiB VMEM; keep the product modest on v7x's 64 MiB).
_TQ = 128   # target rows per tile
_TK = 128   # source columns per tile (lane-dense axis)
_NEG_INF = -1e30


def _round_up(x, m):
    return ((x + m - 1) // m) * m


# ----------------------------------------------------------------------------
# Kernels
# ----------------------------------------------------------------------------
def _gat_project_kernel(x_ref, w_ref, b_ref, out_ref):
    """Fused [lin_l | lin_r] projection: bf16 operands, f32 accumulation."""
    out_ref[...] = (
        jnp.dot(x_ref[...], w_ref[...], preferred_element_type=jnp.float32)
        + b_ref[...])


def _gatv2_attn_kernel(xr_ref, xlt_ref, xl_ref, att_ref, bias_ref, adj_ref,
                       out_ref, m_ref, l_ref, acc_ref, *, apply_relu):
    """One (target_tile, source_tile) step of flash-style GATv2 attention."""
    k = pl.program_id(1)

    @pl.when(k == 0)
    def _():
        m_ref[...] = jnp.full_like(m_ref, _NEG_INF)
        l_ref[...] = jnp.zeros_like(l_ref)
        acc_ref[...] = jnp.zeros_like(acc_ref)

    xr = xr_ref[...]            # (tq, H) f32   target projections (lin_r)
    xlt = xlt_ref[...]          # (H, tk) f32   source projections (lin_l)^T
    n_feat = xr.shape[1]

    # e[q, s] = sum_h att[h] * leaky_relu(xr[q, h] + xl[s, h], 0.2)
    # Lane-dense over the source axis; the small head-feature dim is an
    # unrolled loop so intermediates stay (tq, tk) (no (tq, H, tk) tensor).
    e = jnp.zeros((xr.shape[0], xlt.shape[1]), jnp.float32)
    for f in range(n_feat):
        s_f = xr[:, f:f + 1] + xlt[f:f + 1, :]           # (tq, tk)
        s_f = jnp.where(s_f > 0, s_f, 0.2 * s_f)         # leaky_relu(0.2)
        e = e + att_ref[f] * s_f                         # att scalar from SMEM

    mask = adj_ref[...].astype(jnp.int32) != 0           # int8 mask, read once
    e = jnp.where(mask, e, _NEG_INF)

    m_prev = m_ref[...]
    m_new = jnp.maximum(m_prev, jnp.max(e, axis=-1, keepdims=True))
    corr = jnp.exp(m_prev - m_new)
    p = jnp.where(mask, jnp.exp(e - m_new), 0.0)          # unnormalized weights

    l_ref[...] = corr * l_ref[...] + jnp.sum(p, axis=-1, keepdims=True)
    acc_ref[...] = corr * acc_ref[...] + jnp.dot(
        p.astype(jnp.bfloat16), xl_ref[...],              # xl_ref is bf16
        preferred_element_type=jnp.float32)
    m_ref[...] = m_new

    @pl.when(k == pl.num_programs(1) - 1)
    def _():
        l = l_ref[...]
        l_safe = jnp.where(l > 0.0, l, 1.0)               # isolated/padded rows
        out = acc_ref[...] * pl.reciprocal(l_safe, approx=True) + bias_ref[...]
        if apply_relu:                                    # act='relu' between GAT layers
            out = jnp.maximum(out, 0.0)
        out_ref[...] = out


def _head_kernel(g_ref, pool_ref, e1_ref, wpre_ref, bpre_ref, wmean_ref,
                 bmean_ref, wpost_ref, bpost_ref, gamma_ref, beta_ref,
                 wproj_ref, bproj_ref, out_ref, *, n_layers):
    """preReadout -> mean readout -> postMean -> postCombination -> projection."""
    dg = wpre_ref.shape[1]
    # preReadout: Linear(dg -> dg) on every node, then per-protein mean pool.
    g = jnp.dot(g_ref[...], wpre_ref[...],
                preferred_element_type=jnp.float32) + bpre_ref[...]       # (N, dg)
    gat_read = jnp.dot(pool_ref[...], g,
                       preferred_element_type=jnp.float32)                 # (B, dg)
    # postMean: Linear(480 -> dg) on the per-protein 1D embedding.
    mean_out = jnp.dot(e1_ref[...], wmean_ref[...],
                       preferred_element_type=jnp.float32) + bmean_ref[...]  # (B, dg)

    # combined = concat([mean_out, gat_read], -1); the first postCombination
    # Linear is applied as a split matmul to avoid an in-kernel lane concat.
    w0 = wpost_ref[0]
    h = (jnp.dot(mean_out, w0[:dg, :], preferred_element_type=jnp.float32)
         + jnp.dot(gat_read, w0[dg:, :], preferred_element_type=jnp.float32)
         + bpost_ref[0])
    for l in range(n_layers):
        if l > 0:
            h = jnp.dot(h, wpost_ref[l],
                        preferred_element_type=jnp.float32) + bpost_ref[l]
        h = jnp.where(h > 0, h, 0.01 * h)                  # nn.LeakyReLU default
        mu = jnp.mean(h, axis=-1, keepdims=True)
        var = jnp.mean(jnp.square(h - mu), axis=-1, keepdims=True)
        h = (h - mu) * lax.rsqrt(var + 1e-5)               # nn.LayerNorm eps
        h = h * gamma_ref[l] + beta_ref[l]

    out_ref[...] = jnp.dot(h, wproj_ref[...],
                           preferred_element_type=jnp.float32) + bproj_ref[...]


def _proto_dist_kernel(pos_ref, neg_ref, qry_ref, out_ref):
    """Prototype means and squared Euclidean distances -> (Q, 2)."""
    pos_proto = jnp.mean(pos_ref[...], axis=0, keepdims=True)   # (1, D)
    neg_proto = jnp.mean(neg_ref[...], axis=0, keepdims=True)   # (1, D)
    q = qry_ref[...]                                            # (Q, D)
    out_ref[:, 0:1] = jnp.sum(jnp.square(q - pos_proto), axis=-1, keepdims=True)
    out_ref[:, 1:2] = jnp.sum(jnp.square(q - neg_proto), axis=-1, keepdims=True)


# ----------------------------------------------------------------------------
# Wrappers
# ----------------------------------------------------------------------------
def gat_project(x_bf16, w_bf16, b, *, tm=_TQ):
    n, fin = x_bf16.shape
    two_h = w_bf16.shape[1]
    return pl.pallas_call(
        _gat_project_kernel,
        out_shape=jax.ShapeDtypeStruct((n, two_h), jnp.float32),
        grid_spec=pltpu.PrefetchScalarGridSpec(
            num_scalar_prefetch=0,
            grid=(n // tm,),
            in_specs=[pl.BlockSpec((tm, fin), lambda i: (i, 0)),
                      pl.BlockSpec((fin, two_h), lambda i: (0, 0)),
                      pl.BlockSpec((1, two_h), lambda i: (0, 0))],
            out_specs=pl.BlockSpec((tm, two_h), lambda i: (i, 0))),
        compiler_params=pltpu.CompilerParams(
            dimension_semantics=("parallel",)),
    )(x_bf16, w_bf16, b)


def gatv2_attention(xr, xl_t, xl_bf16, att, bias, adj_i8, *, apply_relu,
                    tq=_TQ, tk=_TK):
    n, h = xr.shape
    kernel = functools.partial(_gatv2_attn_kernel, apply_relu=apply_relu)
    return pl.pallas_call(
        kernel,
        out_shape=jax.ShapeDtypeStruct((n, h), jnp.float32),
        grid_spec=pltpu.PrefetchScalarGridSpec(
            num_scalar_prefetch=0,
            grid=(n // tq, n // tk),
            in_specs=[
                pl.BlockSpec((tq, h), lambda i, k: (i, 0)),      # xr (target)
                pl.BlockSpec((h, tk), lambda i, k: (0, k)),      # xl^T (scores)
                pl.BlockSpec((tk, h), lambda i, k: (k, 0)),      # xl bf16 (p@xl)
                pl.BlockSpec(memory_space=pltpu.MemorySpace.SMEM),  # att scalars
                pl.BlockSpec((1, h), lambda i, k: (0, 0)),       # conv bias
                pl.BlockSpec((tq, tk), lambda i, k: (i, k)),     # adjacency int8
            ],
            out_specs=pl.BlockSpec((tq, h), lambda i, k: (i, 0)),
            scratch_shapes=[
                pltpu.VMEM((tq, 1), jnp.float32),    # running max m
                pltpu.VMEM((tq, 1), jnp.float32),    # running denom l
                pltpu.VMEM((tq, h), jnp.float32),    # running numerator acc
            ]),
        compiler_params=pltpu.CompilerParams(
            dimension_semantics=("parallel", "arbitrary"),
            vmem_limit_bytes=32 * 1024 * 1024),
    )(xr, xl_t, xl_bf16, att, bias, adj_i8)


def gatv2_layer(x, lp, adj_i8, *, apply_relu):
    """One GATv2Conv layer (heads=1; self-loops baked into adj)."""
    w = lp["w_lr"]                       # (Fin_pad, 2H) bf16, [lin_l | lin_r]
    h = w.shape[1] // 2
    xlr = gat_project(x.astype(jnp.bfloat16), w, lp["b_lr"])
    xl, xr = xlr[:, :h], xlr[:, h:]      # source / target projections (f32)
    return gatv2_attention(xr, jnp.transpose(xl), xl.astype(jnp.bfloat16),
                           lp["att"], lp["bias"], adj_i8,
                           apply_relu=apply_relu)


def readout_head(gat_out, pool, embed1d, hp):
    n_layers = hp["wpost"].shape[0]
    b = pool.shape[0]
    proj = hp["wproj"].shape[1]
    kernel = functools.partial(_head_kernel, n_layers=n_layers)
    vmem = pl.BlockSpec(memory_space=pltpu.MemorySpace.VMEM)
    return pl.pallas_call(
        kernel,
        out_shape=jax.ShapeDtypeStruct((b, proj), jnp.float32),
        in_specs=[vmem] * 13,
        out_specs=vmem,
    )(gat_out, pool, embed1d, hp["wpre"], hp["bpre"], hp["wmean"], hp["bmean"],
      hp["wpost"], hp["bpost"], hp["gamma"], hp["beta"], hp["wproj"],
      hp["bproj"])


def prototype_distances(pos_emb, neg_emb, qry_emb):
    q = qry_emb.shape[0]
    vmem = pl.BlockSpec(memory_space=pltpu.MemorySpace.VMEM)
    return pl.pallas_call(
        _proto_dist_kernel,
        out_shape=jax.ShapeDtypeStruct((q, 2), jnp.float32),
        in_specs=[vmem] * 3,
        out_specs=vmem,
    )(pos_emb, neg_emb, qry_emb)


# ----------------------------------------------------------------------------
# Model forward (ProteinEmbedder + prototypeClassifier)
# ----------------------------------------------------------------------------
def protein_embedder_forward(embed2d, embed1d, seqlens, params):
    """ProteinEmbedder.forward for one batch of pre-embedded proteins."""
    n = int(sum(seqlens))
    n_pad = _round_up(n, max(_TQ, _TK))
    fin_pad = params["gat"][0]["w_lr"].shape[0]
    x = jnp.pad(embed2d, ((0, n_pad - n), (0, fin_pad - embed2d.shape[1])))

    adj_i8 = build_contact_adjacency(seqlens, n_pad)
    pool = build_pool_matrix(seqlens, n_pad)

    n_gat = len(params["gat"])
    for i, lp in enumerate(params["gat"]):       # adj re-streamed per layer
        x = gatv2_layer(x, lp, adj_i8, apply_relu=(i < n_gat - 1))
    # gat_dropout is a no-op in the eval-mode forward.
    return readout_head(x, pool, embed1d, params["head"])


def prototype_classifier_forward(pos_set, neg_set, qry_set, params, batch_size):
    """prototypeClassifier.forward: pos/neg prototypes + query sq-distances."""
    def embed_set(pset):
        embeds = []
        for start in range(0, len(pset["seqlens"]), batch_size):
            stop = start + batch_size
            embeds.append(protein_embedder_forward(
                jnp.concatenate(pset["embed2d"][start:stop], axis=0),
                jnp.stack(pset["embed1d"][start:stop], axis=0),
                pset["seqlens"][start:stop], params))
        return jnp.concatenate(embeds, axis=0)

    pos_emb = embed_set(pos_set)
    neg_emb = embed_set(neg_set)
    qry_emb = embed_set(qry_set)
    # Reference builds stack((queryEmbeddings, queryEmbedding)) -- a typo for
    # two copies of queryEmbeddings -- subtracts the pos/neg prototypes,
    # squares, sums over features and returns the (Q, 2) transpose.
    return prototype_distances(pos_emb, neg_emb, qry_emb)


# ----------------------------------------------------------------------------
# Deterministic parameter / input construction (synthetic, no checkpoint)
# ----------------------------------------------------------------------------
def init_params(key, hyper, in_channels=480):
    d = hyper["postcomb_dim"]
    dg = d // 2
    hid = hyper["gat_hidden_size"]
    in_pad = _round_up(in_channels, 128)      # 480 -> 512, aligned MXU K steps
    dims = [in_channels] + [hid] * (hyper["gat_layers"] - 1) + [dg]
    pads = [in_pad] + [hid] * (hyper["gat_layers"] - 1) + [dg]
    n_post = hyper["postcomb_layers"]

    keys = iter(jax.random.split(key, 64))

    def dense(fan_in, fan_out, pad_in=None):
        w = (jax.random.normal(next(keys), (fan_in, fan_out), jnp.float32)
             / jnp.sqrt(jnp.float32(fan_in)))
        if pad_in is not None and pad_in > fan_in:
            w = jnp.pad(w, ((0, pad_in - fan_in), (0, 0)))
        return w

    gat = []
    for l in range(hyper["gat_layers"]):
        fi, fo, fp = dims[l], dims[l + 1], pads[l]
        wl = dense(fi, fo, pad_in=fp)         # lin_l (source)
        wr = dense(fi, fo, pad_in=fp)         # lin_r (target)
        gat.append(dict(
            w_lr=jnp.concatenate([wl, wr], axis=1).astype(jnp.bfloat16),
            b_lr=jnp.zeros((1, 2 * fo), jnp.float32),
            att=0.1 * jax.random.normal(next(keys), (fo,), jnp.float32),
            bias=jnp.zeros((1, fo), jnp.float32),
        ))

    # postCombination = Sequential(*[Linear, LeakyReLU, LayerNorm] * L): the
    # Python list-multiplication repeats the SAME module instances, so the
    # Linear / LayerNorm weights are shared across repetitions.
    wpost_shared = dense(d, d)
    head = dict(
        wpre=dense(dg, dg),                                   # preReadout
        bpre=jnp.zeros((1, dg), jnp.float32),
        wmean=dense(in_channels, dg),                         # postMean
        bmean=jnp.zeros((1, dg), jnp.float32),
        wpost=jnp.stack([wpost_shared] * n_post),
        bpost=jnp.zeros((n_post, 1, d), jnp.float32),
        gamma=jnp.ones((n_post, 1, d), jnp.float32),
        beta=jnp.zeros((n_post, 1, d), jnp.float32),
        wproj=dense(d, hyper["projection_space_dims"]),       # projection
        bproj=jnp.zeros((1, hyper["projection_space_dims"]), jnp.float32),
    )
    return dict(gat=gat, head=head)


def build_contact_adjacency(seqlens, n_pad):
    # TODO(synk): buildContactGraph parses a protein contact file; synthesize a
    # deterministic chain-contact graph (|i - j| <= 2 within each protein, self
    # loops included as GATv2Conv add_self_loops=True would) instead.
    adj = np.zeros((n_pad, n_pad), np.int8)
    off = 0
    for length in seqlens:
        idx = np.arange(length)
        band = np.abs(idx[:, None] - idx[None, :]) <= 2
        adj[off:off + length, off:off + length] = band.astype(np.int8)
        off += length
    return jnp.asarray(adj)


def build_pool_matrix(seqlens, n_pad):
    pool = np.zeros((len(seqlens), n_pad), np.float32)
    off = 0
    for i, length in enumerate(seqlens):
        pool[i, off:off + length] = 1.0 / length
        off += length
    return jnp.asarray(pool)


if __name__ == "__main__":
    hyper = dict(
        gat_hidden_size=32,
        gat_layers=2,
        gat_dropout=0.0,          # dropout is a no-op in the eval-mode forward
        postcomb_dim=32,
        postcomb_layers=2,
        projection_space_dims=8,
    )
    batch_size = 2
    # Two small "proteins" per set; each batch pads to 256 nodes -> a 2x2
    # attention grid (exercises init/accumulate/finalize and padding).
    set_seqlens = dict(pos=[100, 90], neg=[80, 95], qry=[70, 85])

    key = jax.random.PRNGKey(0)
    k_param, k_emb = jax.random.split(key)
    params = init_params(k_param, hyper)

    # TODO(synk): self.emb.Embeddings2D / Embeddings1D are an external
    # pretrained per-residue / per-protein embedder (480-dim); use
    # deterministic random features of the same shapes instead.
    def make_set(k, seqlens):
        ks = jax.random.split(k, 2 * len(seqlens))
        return dict(
            seqlens=list(seqlens),
            embed2d=[jax.random.normal(ks[2 * i], (L, 480), jnp.float32)
                     for i, L in enumerate(seqlens)],
            embed1d=[jax.random.normal(ks[2 * i + 1], (480,), jnp.float32)
                     for i in range(len(seqlens))],
        )

    kp, kn, kq = jax.random.split(k_emb, 3)
    pos_set = make_set(kp, set_seqlens["pos"])
    neg_set = make_set(kn, set_seqlens["neg"])
    qry_set = make_set(kq, set_seqlens["qry"])

    out = prototype_classifier_forward(pos_set, neg_set, qry_set, params,
                                       batch_size)
    out = jax.block_until_ready(out)
    assert out.shape == (len(set_seqlens["qry"]), 2)
    assert out.dtype == jnp.float32
    assert bool(jnp.all(jnp.isfinite(out)))
    print("KERNEL_OK")
</pallas_src>

<mosaic_0001>
module attributes {stable_mosaic.version = 11 : i64} {
  func.func @_gat_project_kernel(%arg0: i32, %arg1: memref<128x512xbf16, #tpu.memory_space<vmem>>, %arg2: memref<512x64xbf16, #tpu.memory_space<vmem>>, %arg3: memref<1x64xf32, #tpu.memory_space<vmem>>, %arg4: memref<128x64xf32, #tpu.memory_space<vmem>>) attributes {dimension_semantics = [#tpu.dimension_semantics<parallel>], iteration_bounds = array<i64: 2>, scalar_prefetch = 0 : i64, scratch_operands = 0 : i64, tpu.core_type = #tpu.core_type<tc>, window_params = [{transform_indices = @transform_0, window_bounds = array<i64: 128, 512>}, {pipeline_mode = #tpu.pipeline_mode<synchronous>, transform_indices = @transform_1, window_bounds = array<i64: 512, 64>}, {pipeline_mode = #tpu.pipeline_mode<synchronous>, transform_indices = @transform_2, window_bounds = array<i64: 1, 64>}, {transform_indices = @transform_3, window_bounds = array<i64: 128, 64>}]} {
    %c0 = arith.constant 0 : index
    %c0_0 = arith.constant 0 : index
    %0 = vector.load %arg1[%c0, %c0_0] : memref<128x512xbf16, #tpu.memory_space<vmem>>, vector<128x512xbf16>
    %c0_1 = arith.constant 0 : index
    %c0_2 = arith.constant 0 : index
    %1 = vector.load %arg2[%c0_1, %c0_2] : memref<512x64xbf16, #tpu.memory_space<vmem>>, vector<512x64xbf16>
    %cst = arith.constant dense<0.000000e+00> : vector<128x64xf32>
    %2 = tpu.matmul %0, %1, %cst {dimension_numbers = #tpu.dot_dimension_numbers<[1], [0], [0], [1], [0, 0, 1, 1], [], []>} : vector<128x512xbf16>, vector<512x64xbf16>, vector<128x64xf32> -> vector<128x64xf32>
    %c0_3 = arith.constant 0 : index
    %c0_4 = arith.constant 0 : index
    %3 = vector.load %arg3[%c0_3, %c0_4] : memref<1x64xf32, #tpu.memory_space<vmem>>, vector<1x64xf32>
    %4 = vector.broadcast %3 : vector<1x64xf32> to vector<128x64xf32>
    %5 = arith.addf %2, %4 : vector<128x64xf32>
    %c0_5 = arith.constant 0 : index
    %c0_6 = arith.constant 0 : index
    %6 = vector.load %arg4[%c0_5, %c0_6] : memref<128x64xf32, #tpu.memory_space<vmem>>, vector<128x64xf32>
    tpu.vector_store %arg4[%c0_5, %c0_6], %5 {strides = array<i32>} : memref<128x64xf32, #tpu.memory_space<vmem>>, vector<128x64xf32>,
    return
  }
  func.func @transform_0(%arg0: i32) -> (i32, i32) {
    %c0_i32 = arith.constant 0 : i32
    %c0_i32_0 = arith.constant 0 : i32
    return %arg0, %c0_i32 : i32, i32
  }
  func.func @transform_1(%arg0: i32) -> (i32, i32) {
    %c0_i32 = arith.constant 0 : i32
    %c0_i32_0 = arith.constant 0 : i32
    %c0_i32_1 = arith.constant 0 : i32
    return %c0_i32, %c0_i32_0 : i32, i32
  }
  func.func @transform_2(%arg0: i32) -> (i32, i32) {
    %c0_i32 = arith.constant 0 : i32
    %c0_i32_0 = arith.constant 0 : i32
    %c0_i32_1 = arith.constant 0 : i32
    return %c0_i32, %c0_i32_0 : i32, i32
  }
  func.func @transform_3(%arg0: i32) -> (i32, i32) {
    %c0_i32 = arith.constant 0 : i32
    %c0_i32_0 = arith.constant 0 : i32
    return %arg0, %c0_i32 : i32, i32
  }
}

</mosaic_0001>

<llo_original>
// kernel: tpu_custom_call.1
$region0: #{tpu_custom_call.1}
  #allocation0 [shape = 'u32[]', space=smem, size = 0x4, offset = 0x4, fixed_abs, tag = 'smem constant byte address 0x4 - core index']
  #allocation1 [shape = 'u32[144,128]{1,0:T(1,128)}', space=vmem, size = 0x12000, scoped, tag = 'internal scratch']
  %s0 = inlined_call_operand.hbm [shape: bf16[256,512], index: 0, kind: input, shape index: {}]
  %s1 = inlined_call_operand.vmem [shape: bf16[512,64], index: 1, kind: input, shape index: {}]
  %s2 = inlined_call_operand.vmem [shape: f32[1,64], index: 2, kind: input, shape index: {}]
  %s3 = inlined_call_operand.vmem [shape: f32[256,64], index: 3, kind: output, shape index: {}]
  %s4 = sld [smem:[#allocation0]]
  $region49: #{tpu_custom_call.1} parent=0
    _
  %s6 = ssub.s32 1, %s4
  %s7 = scalar_select 0, %s6, %s4
  $region1: #{tpu_custom_call.1} parent=0
    #allocation2 [shape = 'u8[262144]{0}', space=vmem, size = 0x40000, scoped, tag = 'input window, operand 0']
    #allocation3 [shape = 's32[2]{0}', space=sflag, size = 0x8, scoped, tag = 'scoped memory for tpu_custom_call.1']
    %8 = vsyncpa [#allocation3], 0
    %s9 = scalar_lea.sflag [#allocation3], 1
    %10 = vsyncpa %s9, 0
    loop: start=0, step=1, limit=4
    $region2: #{tpu_custom_call.1} parent=1 // loop_pre_header
      _
    $region3: #{tpu_custom_call.1} parent=1 // loop_header
      %s12 = sphi 0, %s16
      %p13 = scmp.ge.s32.totalorder %s12, 4
      %s22 = sphi 0, %s24
      %s25 = sphi 0, %s22
      %s26 = sphi 0, %s25
      %s42 = sphi 0, %s26
      %s46 = sphi 0, %s46
      %s48 = sphi 0, %s46
      %s49 = sphi 0, %s48
      %s63 = sphi 0, %s49
      %s67 = sphi 0, %s67
      %s69 = sphi 0, %s67
      %s70 = sphi 0, %s69
      %s84 = sphi 0, %s70
      %s90 = sphi 0, %s92
      %s93 = sphi 0, %s90
      %s94 = sphi 0, %s93
      %s110 = sphi 0, %s94
    $region4: #{tpu_custom_call.1} parent=1 // loop_header_branch
      %15 = sbr.rel (%p13) target = $region8
    $region5: #{tpu_custom_call.1} parent=1 // loop_body
      %s17 = ssub.s32 %s12, 1
      %s18 = ssub.s32 %s12, 2
      %s19 = sadd.s32 %s12, 1
      %s20 = ssub.s32 %s12, %s19
      %p21 = scmp.eq.s32.totalorder %s20, 0
      %s23 = sadd.s32 %s22, 1
      %s24 = scalar_select %p21, %s22, %s23
      %p27 = pneg %p21
      %p28 = scmp.eq.s32.totalorder %s12, 1
      %p29 = por %p27, %p28
      %p30 = scmp.ne.s32.totalorder %s22, %s25
      %p31 = scmp.eq.s32.totalorder %s12, 0
      %p32 = por %p30, %p31
      %p33 = scmp.ne.s32.totalorder %s22, %s25
      %p34 = scmp.eq.s32.totalorder %s17, 1
      %p35 = por %p33, %p34
      %p36 = scmp.ne.s32.totalorder %s25, %s26
      %p37 = scmp.eq.s32.totalorder %s17, 0
      %p38 = por %p36, %p37
      %p39 = scmp.ne.s32.totalorder %s25, %s26
      %p40 = scmp.eq.s32.totalorder %s18, 1
      %p41 = por %p39, %p40
      %p43 = scmp.ne.s32.totalorder %s26, %s42
      %p44 = scmp.eq.s32.totalorder %s18, 0
      %p45 = por %p43, %p44
      %s47 = sadd.s32 %s46, 1
      %p50 = scmp.eq.s32.totalorder %s12, 1
      %p51 = scmp.ne.s32.totalorder %s46, %s48
      %p52 = scmp.eq.s32.totalorder %s12, 0
      %p53 = por %p51, %p52
      %p54 = scmp.ne.s32.totalorder %s46, %s48
      %p55 = scmp.eq.s32.totalorder %s17, 1
      %p56 = por %p54, %p55
      %p57 = scmp.ne.s32.totalorder %s48, %s49
      %p58 = scmp.eq.s32.totalorder %s17, 0
      %p59 = por %p57, %p58
      %p60 = scmp.ne.s32.totalorder %s48, %s49
      %p61 = scmp.eq.s32.totalorder %s18, 1
      %p62 = por %p60, %p61
      %p64 = scmp.ne.s32.totalorder %s49, %s63
      %p65 = scmp.eq.s32.totalorder %s18, 0
      %p66 = por %p64, %p65
      %s68 = sadd.s32 %s67, 1
      %p71 = scmp.eq.s32.totalorder %s12, 1
      %p72 = scmp.ne.s32.totalorder %s67, %s69
      %p73 = scmp.eq.s32.totalorder %s12, 0
      %p74 = por %p72, %p73
      %p75 = scmp.ne.s32.totalorder %s67, %s69
      %p76 = scmp.eq.s32.totalorder %s17, 1
      %p77 = por %p75, %p76
      %p78 = scmp.ne.s32.totalorder %s69, %s70
      %p79 = scmp.eq.s32.totalorder %s17, 0
      %p80 = por %p78, %p79
      %p81 = scmp.ne.s32.totalorder %s69, %s70
      %p82 = scmp.eq.s32.totalorder %s18, 1
      %p83 = por %p81, %p82
      %p85 = scmp.ne.s32.totalorder %s70, %s84
      %p86 = scmp.eq.s32.totalorder %s18, 0
      %p87 = por %p85, %p86
      %s88 = ssub.s32 %s12, %s19
      %p89 = scmp.eq.s32.totalorder %s88, 0
      %s91 = sadd.s32 %s90, 1
      %s92 = scalar_select %p89, %s90, %s91
      %p95 = pneg %p89
      %p96 = scmp.eq.s32.totalorder %s12, 1
      %p97 = por %p95, %p96
      %p98 = scmp.ne.s32.totalorder %s90, %s93
      %p99 = scmp.eq.s32.totalorder %s12, 0
      %p100 = por %p98, %p99
      %p101 = scmp.ne.s32.totalorder %s90, %s93
      %p102 = scmp.eq.s32.totalorder %s17, 1
      %p103 = por %p101, %p102
      %p104 = scmp.ne.s32.totalorder %s93, %s94
      %p105 = scmp.eq.s32.totalorder %s17, 0
      %p106 = por %p104, %p105
      %p107 = scmp.ne.s32.totalorder %s93, %s94
      %p108 = scmp.eq.s32.totalorder %s18, 1
      %p109 = por %p107, %p108
      %p111 = scmp.ne.s32.totalorder %s94, %s110
      %p112 = scmp.eq.s32.totalorder %s18, 0
      %p113 = por %p111, %p112
      %p114 = scmp.le.s32.totalorder 1, %s12
      %p115 = scmp.lt.s32.totalorder %s12, 3
      %p116 = pnand %p114, %p115
      %p117 = pneg %p116
      // Predicated region
      $region9: #{tpu_custom_call.1} parent=5 // pred_check
        _
      $region10: #{tpu_custom_call.1} parent=5 // pred_check_branch
        %119 = sbr.rel (%p116) target = $region12
      $region11: #{tpu_custom_call.1} parent=5 // pred_region
        %s120 = ssub.s32 %s12, 1
        // Predicated region
        $region13: #{tpu_custom_call.1} parent=11 // pred_check
          %p121 = pneg %p59
        $region14: #{tpu_custom_call.1} parent=11 // pred_check_branch
          %123 = sbr.rel (%p121) target = $region16
        $region15: #{tpu_custom_call.1} parent=11 // pred_region
          _
        $region16: #{tpu_custom_call.1} parent=11 // pred_fallthru
          _
        // Predicated region
        $region17: #{tpu_custom_call.1} parent=11 // pred_check
          %p124 = pneg %p80
        $region18: #{tpu_custom_call.1} parent=11 // pred_check_branch
          %126 = sbr.rel (%p124) target = $region20
        $region19: #{tpu_custom_call.1} parent=11 // pred_region
          _
        $region20: #{tpu_custom_call.1} parent=11 // pred_fallthru
          _
      $region12: #{tpu_custom_call.1} parent=5 // pred_fallthru
        _
      %p127 = scmp.lt.s32.totalorder %s12, 2
      // Predicated region
      $region21: #{tpu_custom_call.1} parent=5 // pred_check
        %p128 = pneg %p127
      $region22: #{tpu_custom_call.1} parent=5 // pred_check_branch
        %130 = sbr.rel (%p128) target = $region24
      $region23: #{tpu_custom_call.1} parent=5 // pred_region
        // Predicated region
        $region25: #{tpu_custom_call.1} parent=23 // pred_check
          %p131 = pneg %p32
        $region26: #{tpu_custom_call.1} parent=23 // pred_check_branch
          %133 = sbr.rel (%p131) target = $region28
        $region27: #{tpu_custom_call.1} parent=23 // pred_region
          %s134 = sand.u32 %s22, 1
          %s135 = scalar_lea.sflag [#allocation3], %s134
          %s136 = sand.u32 %s22, 1
          %s137 = smul.addr %s136, 256
          %s138 = scalar_lea.vmem [#allocation2], %s137
          %s139 = smul.u32 16, %s12
          %s141 = ssub.s32 4096, 4096
          %142 = vsyncadd %s135, %s141
          %s143 = smul.addr %s139, 4
          %s144 = smul.addr %s143, 64
          %s145 = scalar_lea.hbm %s0, %s144
          %s146 = sshll.u32 %s138, 4
          %s147 = int_to_ptr.vmem [resolvable:$true] %s146
          %152 = dma.hbm_to_vmem [thread:$0]  %s145, 4096, %s147, %s135, 256, 256, 16
        $region28: #{tpu_custom_call.1} parent=23 // pred_fallthru
          _
      $region24: #{tpu_custom_call.1} parent=5 // pred_fallthru
        _
      %p153 = scmp.le.s32.totalorder 1, %s12
      %p154 = scmp.lt.s32.totalorder %s12, 3
      %p155 = pnand %p153, %p154
      %p156 = pneg %p155
      // Predicated region
      $region29: #{tpu_custom_call.1} parent=5 // pred_check
        _
      $region30: #{tpu_custom_call.1} parent=5 // pred_check_branch
        %158 = sbr.rel (%p155) target = $region32
      $region31: #{tpu_custom_call.1} parent=5 // pred_region
        %s159 = ssub.s32 %s12, 1
        %s160 = sand.u32 %s25, 1
        %s161 = scalar_lea.sflag [#allocation3], %s160
        %s162 = sand.u32 %s25, 1
        %s163 = smul.addr %s162, 256
        %s164 = scalar_lea.vmem [#allocation2], %s163
        // Predicated region
        $region33: #{tpu_custom_call.1} parent=31 // pred_check
          %p165 = pneg %p38
        $region34: #{tpu_custom_call.1} parent=31 // pred_check_branch
          %167 = sbr.rel (%p165) target = $region36
        $region35: #{tpu_custom_call.1} parent=31 // pred_region
          %168 = dma.done %s161, 4096
        $region36: #{tpu_custom_call.1} parent=31 // pred_fallthru
          _
        %s169 = sand.u32 %s25, 1
        %s170 = scalar_lea.sflag [#allocation3], %s169
        %s171 = sand.u32 %s25, 1
        %s172 = smul.addr %s171, 256
        %s173 = scalar_lea.vmem [#allocation2], %s172
        %p174 = pneg %p38
        %p175 = pneg %p35
        %p176 = pneg %p59
        %p177 = pneg %p56
        %p178 = pneg %p80
        %p179 = pneg %p77
        %p180 = pneg %p106
        %p181 = pneg %p103
        %s182 = smul.u32 16, %s17
        %p183 = scmp.lt.s32.totalorder %s182, 31
        %s184 = scalar_select %p183, %s182, 31
        %s185 = smul.addr %s184, 8
        %s186 = scalar_lea.vmem %s3, %s185
        %s187 = smul.u32 16, %s17
        %s188 = smul.u32 16, %s17
        %p189 = scmp.lt.s32.totalorder %s188, 31
        %s190 = scalar_select %p189, %s188, 31
        %s191 = smul.addr %s190, 8
        %s192 = scalar_lea.vmem %s3, %s191
        %s193 = smul.u32 16, %s17
        %v195 = vld [vmem:[%s164] sm:$0xff]
        %v196 = vld [vmem:[%s164 + $0x8] sm:$0xff]
        %v197 = vld [vmem:[%s164 + $0x10] sm:$0xff]
        %v198 = vld [vmem:[%s164 + $0x18] sm:$0xff]
        %v199 = vld [vmem:[%s164 + $0x20] sm:$0xff]
        %v200 = vld [vmem:[%s164 + $0x28] sm:$0xff]
        %v201 = vld [vmem:[%s164 + $0x30] sm:$0xff]
        %v202 = vld [vmem:[%s164 + $0x38] sm:$0xff]
        %v203 = vld [vmem:[%s164 + $0x40] sm:$0xff]
        %v204 = vld [vmem:[%s164 + $0x48] sm:$0xff]
        %v205 = vld [vmem:[%s164 + $0x50] sm:$0xff]
        %v206 = vld [vmem:[%s164 + $0x58] sm:$0xff]
        %v207 = vld [vmem:[%s164 + $0x60] sm:$0xff]
        %v208 = vld [vmem:[%s164 + $0x68] sm:$0xff]
        %v209 = vld [vmem:[%s164 + $0x70] sm:$0xff]
        %v210 = vld [vmem:[%s164 + $0x78] sm:$0xff]
        %v211 = vld [vmem:[%s164 + $0x80] sm:$0xff]
        %v212 = vld [vmem:[%s164 + $0x88] sm:$0xff]
        %v213 = vld [vmem:[%s164 + $0x90] sm:$0xff]
        %v214 = vld [vmem:[%s164 + $0x98] sm:$0xff]
        %v215 = vld [vmem:[%s164 + $0xa0] sm:$0xff]
        %v216 = vld [vmem:[%s164 + $0xa8] sm:$0xff]
        %v217 = vld [vmem:[%s164 + $0xb0] sm:$0xff]
        %v218 = vld [vmem:[%s164 + $0xb8] sm:$0xff]
        %v219 = vld [vmem:[%s164 + $0xc0] sm:$0xff]
        %v220 = vld [vmem:[%s164 + $0xc8] sm:$0xff]
        %v221 = vld [vmem:[%s164 + $0xd0] sm:$0xff]
        %v222 = vld [vmem:[%s164 + $0xd8] sm:$0xff]
        %v223 = vld [vmem:[%s164 + $0xe0] sm:$0xff]
        %v224 = vld [vmem:[%s164 + $0xe8] sm:$0xff]
        %v225 = vld [vmem:[%s164 + $0xf0] sm:$0xff]
        %v226 = vld [vmem:[%s164 + $0xf8] sm:$0xff]
        %v227 = vld [vmem:[%s1] sm:$0xf]
        %v228 = vld [vmem:[%s1 + $0x4] sm:$0xf]
        %v229 = vld [vmem:[%s1 + $0x8] sm:$0xf]
        %v230 = vld [vmem:[%s1 + $0xc] sm:$0xf]
        %v231 = vld [vmem:[%s1 + $0x10] sm:$0xf]
        %v232 = vld [vmem:[%s1 + $0x14] sm:$0xf]
        %v233 = vld [vmem:[%s1 + $0x18] sm:$0xf]
        %v234 = vld [vmem:[%s1 + $0x1c] sm:$0xf]
        %v235 = vld [vmem:[%s1 + $0x20] sm:$0xf]
        %v236 = vld [vmem:[%s1 + $0x24] sm:$0xf]
        %v237 = vld [vmem:[%s1 + $0x28] sm:$0xf]
        %v238 = vld [vmem:[%s1 + $0x2c] sm:$0xf]
        %v239 = vld [vmem:[%s1 + $0x30] sm:$0xf]
        %v240 = vld [vmem:[%s1 + $0x34] sm:$0xf]
        %v241 = vld [vmem:[%s1 + $0x38] sm:$0xf]
        %v242 = vld [vmem:[%s1 + $0x3c] sm:$0xf]
        %v243 = vld [vmem:[%s1 + $0x40] sm:$0xf]
        %v244 = vld [vmem:[%s1 + $0x44] sm:$0xf]
        %v245 = vld [vmem:[%s1 + $0x48] sm:$0xf]
        %v246 = vld [vmem:[%s1 + $0x4c] sm:$0xf]
        %v247 = vld [vmem:[%s1 + $0x50] sm:$0xf]
        %v248 = vld [vmem:[%s1 + $0x54] sm:$0xf]
        %v249 = vld [vmem:[%s1 + $0x58] sm:$0xf]
        %v250 = vld [vmem:[%s1 + $0x5c] sm:$0xf]
        %v251 = vld [vmem:[%s1 + $0x60] sm:$0xf]
        %v252 = vld [vmem:[%s1 + $0x64] sm:$0xf]
        %v253 = vld [vmem:[%s1 + $0x68] sm:$0xf]
        %v254 = vld [vmem:[%s1 + $0x6c] sm:$0xf]
        %v255 = vld [vmem:[%s1 + $0x70] sm:$0xf]
        %v256 = vld [vmem:[%s1 + $0x74] sm:$0xf]
        %v257 = vld [vmem:[%s1 + $0x78] sm:$0xf]
        %v258 = vld [vmem:[%s1 + $0x7c] sm:$0xf]
        %v259 = vld [vmem:[%s1 + $0x80] sm:$0xf]
        %v260 = vld [vmem:[%s1 + $0x84] sm:$0xf]
        %v261 = vld [vmem:[%s1 + $0x88] sm:$0xf]
        %v262 = vld [vmem:[%s1 + $0x8c] sm:$0xf]
        %v263 = vld [vmem:[%s1 + $0x90] sm:$0xf]
        %v264 = vld [vmem:[%s1 + $0x94] sm:$0xf]
        %v265 = vld [vmem:[%s1 + $0x98] sm:$0xf]
        %v266 = vld [vmem:[%s1 + $0x9c] sm:$0xf]
        %v267 = vld [vmem:[%s1 + $0xa0] sm:$0xf]
        %v268 = vld [vmem:[%s1 + $0xa4] sm:$0xf]
        %v269 = vld [vmem:[%s1 + $0xa8] sm:$0xf]
        %v270 = vld [vmem:[%s1 + $0xac] sm:$0xf]
        %v271 = vld [vmem:[%s1 + $0xb0] sm:$0xf]
        %v272 = vld [vmem:[%s1 + $0xb4] sm:$0xf]
        %v273 = vld [vmem:[%s1 + $0xb8] sm:$0xf]
        %v274 = vld [vmem:[%s1 + $0xbc] sm:$0xf]
        %v275 = vld [vmem:[%s1 + $0xc0] sm:$0xf]
        %v276 = vld [vmem:[%s1 + $0xc4] sm:$0xf]
        %v277 = vld [vmem:[%s1 + $0xc8] sm:$0xf]
        %v278 = vld [vmem:[%s1 + $0xcc] sm:$0xf]
        %v279 = vld [vmem:[%s1 + $0xd0] sm:$0xf]
        %v280 = vld [vmem:[%s1 + $0xd4] sm:$0xf]
        %v281 = vld [vmem:[%s1 + $0xd8] sm:$0xf]
        %v282 = vld [vmem:[%s1 + $0xdc] sm:$0xf]
        %v283 = vld [vmem:[%s1 + $0xe0] sm:$0xf]
        %v284 = vld [vmem:[%s1 + $0xe4] sm:$0xf]
        %v285 = vld [vmem:[%s1 + $0xe8] sm:$0xf]
        %v286 = vld [vmem:[%s1 + $0xec] sm:$0xf]
        %v287 = vld [vmem:[%s1 + $0xf0] sm:$0xf]
        %v288 = vld [vmem:[%s1 + $0xf4] sm:$0xf]
        %v289 = vld [vmem:[%s1 + $0xf8] sm:$0xf]
        %v290 = vld [vmem:[%s1 + $0xfc] sm:$0xf]
        %v291 = vld [vmem:[%s2] sm:$0x1]
        %v293 = vlaneseq
        %v294 = vshrl.u32 %v293, 7
        %v295 = vsub.s32 0, %v294
        %v296 = vrot.slane %v291, %v295
        %v330 = vunpack.c.l.b16 %v195
        %v331 = vunpack.c.h.b16 %v195
        %v332 = vunpack.c.l.b16 %v196
        %v333 = vunpack.c.h.b16 %v196
        %v334 = vunpack.c.l.b16 %v197
        %v335 = vunpack.c.h.b16 %v197
        %v336 = vunpack.c.l.b16 %v198
        %v337 = vunpack.c.h.b16 %v198
        %v338 = vunpack.c.l.b16 %v199
        %v339 = vunpack.c.h.b16 %v199
        %v340 = vunpack.c.l.b16 %v200
        %v341 = vunpack.c.h.b16 %v200
        %v342 = vunpack.c.l.b16 %v201
        %v343 = vunpack.c.h.b16 %v201
        %v344 = vunpack.c.l.b16 %v202
        %v345 = vunpack.c.h.b16 %v202
        %v346 = vunpack.c.l.b16 %v203
        %v347 = vunpack.c.h.b16 %v203
        %v348 = vunpack.c.l.b16 %v204
        %v349 = vunpack.c.h.b16 %v204
        %v350 = vunpack.c.l.b16 %v205
        %v351 = vunpack.c.h.b16 %v205
        %v352 = vunpack.c.l.b16 %v206
        %v353 = vunpack.c.h.b16 %v206
        %v354 = vunpack.c.l.b16 %v207
        %v355 = vunpack.c.h.b16 %v207
        %v356 = vunpack.c.l.b16 %v208
        %v357 = vunpack.c.h.b16 %v208
        %v358 = vunpack.c.l.b16 %v209
        %v359 = vunpack.c.h.b16 %v209
        %v360 = vunpack.c.l.b16 %v210
        %v361 = vunpack.c.h.b16 %v210
        %v362 = vunpack.c.l.b16 %v211
        %v363 = vunpack.c.h.b16 %v211
        %v364 = vunpack.c.l.b16 %v212
        %v365 = vunpack.c.h.b16 %v212
        %v366 = vunpack.c.l.b16 %v213
        %v367 = vunpack.c.h.b16 %v213
        %v368 = vunpack.c.l.b16 %v214
        %v369 = vunpack.c.h.b16 %v214
        %v370 = vunpack.c.l.b16 %v215
        %v371 = vunpack.c.h.b16 %v215
        %v372 = vunpack.c.l.b16 %v216
        %v373 = vunpack.c.h.b16 %v216
        %v374 = vunpack.c.l.b16 %v217
        %v375 = vunpack.c.h.b16 %v217
        %v376 = vunpack.c.l.b16 %v218
        %v377 = vunpack.c.h.b16 %v218
        %v378 = vunpack.c.l.b16 %v219
        %v379 = vunpack.c.h.b16 %v219
        %v380 = vunpack.c.l.b16 %v220
        %v381 = vunpack.c.h.b16 %v220
        %v382 = vunpack.c.l.b16 %v221
        %v383 = vunpack.c.h.b16 %v221
        %v384 = vunpack.c.l.b16 %v222
        %v385 = vunpack.c.h.b16 %v222
        %v386 = vunpack.c.l.b16 %v223
        %v387 = vunpack.c.h.b16 %v223
        %v388 = vunpack.c.l.b16 %v224
        %v389 = vunpack.c.h.b16 %v224
        %v390 = vunpack.c.l.b16 %v225
        %v391 = vunpack.c.h.b16 %v225
        %v392 = vunpack.c.l.b16 %v226
        %v393 = vunpack.c.h.b16 %v226
        %v394 = vpack.c.b16 %v334, %v330
        %v395 = vpack.c.b16 %v335, %v331
        %v396 = vpack.c.b16 %v336, %v332
        %v397 = vpack.c.b16 %v337, %v333
        %v398 = vpack.c.b16 %v342, %v338
        %v399 = vpack.c.b16 %v343, %v339
        %v400 = vpack.c.b16 %v344, %v340
        %v401 = vpack.c.b16 %v345, %v341
        %v402 = vpack.c.b16 %v350, %v346
        %v403 = vpack.c.b16 %v351, %v347
        %v404 = vpack.c.b16 %v352, %v348
        %v405 = vpack.c.b16 %v353, %v349
        %v406 = vpack.c.b16 %v358, %v354
        %v407 = vpack.c.b16 %v359, %v355
        %v408 = vpack.c.b16 %v360, %v356
        %v409 = vpack.c.b16 %v361, %v357
        %v410 = vpack.c.b16 %v366, %v362
        %v411 = vpack.c.b16 %v367, %v363
        %v412 = vpack.c.b16 %v368, %v364
        %v413 = vpack.c.b16 %v369, %v365
        %v414 = vpack.c.b16 %v374, %v370
        %v415 = vpack.c.b16 %v375, %v371
        %v416 = vpack.c.b16 %v376, %v372
        %v417 = vpack.c.b16 %v377, %v373
        %v418 = vpack.c.b16 %v382, %v378
        %v419 = vpack.c.b16 %v383, %v379
        %v420 = vpack.c.b16 %v384, %v380
        %v421 = vpack.c.b16 %v385, %v381
        %v422 = vpack.c.b16 %v390, %v386
        %v423 = vpack.c.b16 %v391, %v387
        %v424 = vpack.c.b16 %v392, %v388
        %v425 = vpack.c.b16 %v393, %v389
        %v522 = vunpack.c.l.b16 %v227
        %v523 = vunpack.c.l.b16 %v228
        %v524 = vunpack.c.l.b16 %v229
        %v525 = vunpack.c.l.b16 %v230
        %v526 = vunpack.c.l.b16 %v231
        %v527 = vunpack.c.l.b16 %v232
        %v528 = vunpack.c.l.b16 %v233
        %v529 = vunpack.c.l.b16 %v234
        %v530 = vunpack.c.l.b16 %v235
        %v531 = vunpack.c.l.b16 %v236
        %v532 = vunpack.c.l.b16 %v237
        %v533 = vunpack.c.l.b16 %v238
        %v534 = vunpack.c.l.b16 %v239
        %v535 = vunpack.c.l.b16 %v240
        %v536 = vunpack.c.l.b16 %v241
        %v537 = vunpack.c.l.b16 %v242
        %v538 = vunpack.c.l.b16 %v243
        %v539 = vunpack.c.l.b16 %v244
        %v540 = vunpack.c.l.b16 %v245
        %v541 = vunpack.c.l.b16 %v246
        %v542 = vunpack.c.l.b16 %v247
        %v543 = vunpack.c.l.b16 %v248
        %v544 = vunpack.c.l.b16 %v249
        %v545 = vunpack.c.l.b16 %v250
        %v546 = vunpack.c.l.b16 %v251
        %v547 = vunpack.c.l.b16 %v252
        %v548 = vunpack.c.l.b16 %v253
        %v549 = vunpack.c.l.b16 %v254
        %v550 = vunpack.c.l.b16 %v255
        %v551 = vunpack.c.l.b16 %v256
        %v552 = vunpack.c.l.b16 %v257
        %v553 = vunpack.c.l.b16 %v258
        %v554 = vunpack.c.l.b16 %v259
        %v555 = vunpack.c.l.b16 %v260
        %v556 = vunpack.c.l.b16 %v261
        %v557 = vunpack.c.l.b16 %v262
        %v558 = vunpack.c.l.b16 %v263
        %v559 = vunpack.c.l.b16 %v264
        %v560 = vunpack.c.l.b16 %v265
        %v561 = vunpack.c.l.b16 %v266
        %v562 = vunpack.c.l.b16 %v267
        %v563 = vunpack.c.l.b16 %v268
        %v564 = vunpack.c.l.b16 %v269
        %v565 = vunpack.c.l.b16 %v270
        %v566 = vunpack.c.l.b16 %v271
        %v567 = vunpack.c.l.b16 %v272
        %v568 = vunpack.c.l.b16 %v273
        %v569 = vunpack.c.l.b16 %v274
        %v570 = vunpack.c.l.b16 %v275
        %v571 = vunpack.c.l.b16 %v276
        %v572 = vunpack.c.l.b16 %v277
        %v573 = vunpack.c.l.b16 %v278
        %v574 = vunpack.c.l.b16 %v279
        %v575 = vunpack.c.l.b16 %v280
        %v576 = vunpack.c.l.b16 %v281
        %v577 = vunpack.c.l.b16 %v282
        %v578 = vunpack.c.l.b16 %v283
        %v579 = vunpack.c.l.b16 %v284
        %v580 = vunpack.c.l.b16 %v285
        %v581 = vunpack.c.l.b16 %v286
        %v582 = vunpack.c.l.b16 %v287
        %v583 = vunpack.c.l.b16 %v288
        %v584 = vunpack.c.l.b16 %v289
        %v585 = vunpack.c.l.b16 %v290
        %v586 = vpack.c.b16 %v523, %v522
        %v587 = vpack.c.b16 %v525, %v524
        %v588 = vpack.c.b16 %v527, %v526
        %v589 = vpack.c.b16 %v529, %v528
        %v590 = vpack.c.b16 %v531, %v530
        %v591 = vpack.c.b16 %v533, %v532
        %v592 = vpack.c.b16 %v535, %v534
        %v593 = vpack.c.b16 %v537, %v536
        %v594 = vpack.c.b16 %v539, %v538
        %v595 = vpack.c.b16 %v541, %v540
        %v596 = vpack.c.b16 %v543, %v542
        %v597 = vpack.c.b16 %v545, %v544
        %v598 = vpack.c.b16 %v547, %v546
        %v599 = vpack.c.b16 %v549, %v548
        %v600 = vpack.c.b16 %v551, %v550
        %v601 = vpack.c.b16 %v553, %v552
        %v602 = vpack.c.b16 %v555, %v554
        %v603 = vpack.c.b16 %v557, %v556
        %v604 = vpack.c.b16 %v559, %v558
        %v605 = vpack.c.b16 %v561, %v560
        %v606 = vpack.c.b16 %v563, %v562
        %v607 = vpack.c.b16 %v565, %v564
        %v608 = vpack.c.b16 %v567, %v566
        %v609 = vpack.c.b16 %v569, %v568
        %v610 = vpack.c.b16 %v571, %v570
        %v611 = vpack.c.b16 %v573, %v572
        %v612 = vpack.c.b16 %v575, %v574
        %v613 = vpack.c.b16 %v577, %v576
        %v614 = vpack.c.b16 %v579, %v578
        %v615 = vpack.c.b16 %v581, %v580
        %v616 = vpack.c.b16 %v583, %v582
        %v617 = vpack.c.b16 %v585, %v584
        %650 = vmatprep.subr.bf16.mxu0 0
        %651 = vmatpush1.bf16.msra.mxu0 %v586
        %652 = vmatprep.subr.bf16.mxu0 0
        %653 = vmatpush1.bf16.msra.mxu0 %v587
        %654 = vmatprep.subr.bf16.mxu0 0
        %655 = vmatpush1.bf16.msra.mxu0 %v588
        %656 = vmatprep.subr.bf16.mxu0 0
        %657 = vmatpush1.bf16.msra.mxu0 %v589
        %658 = vmatprep.subr.bf16.mxu0 0
        %659 = vmatpush1.bf16.msra.mxu0 %v590
        %660 = vmatprep.subr.bf16.mxu0 0
        %661 = vmatpush1.bf16.msra.mxu0 %v591
        %662 = vmatprep.subr.bf16.mxu0 0
        %663 = vmatpush1.bf16.msra.mxu0 %v592
        %664 = vmatprep.subr.bf16.mxu0 0
        %665 = vmatpush1.bf16.msra.mxu0 %v593
        %666 = vmatprep.subr.bf16.mxu0 0
        %667 = vmatpush1.bf16.msra.mxu0 %v594
        %668 = vmatprep.subr.bf16.mxu0 0
        %669 = vmatpush1.bf16.msra.mxu0 %v595
        %670 = vmatprep.subr.bf16.mxu0 0
        %671 = vmatpush1.bf16.msra.mxu0 %v596
        %672 = vmatprep.subr.bf16.mxu0 0
        %673 = vmatpush1.bf16.msra.mxu0 %v597
        %674 = vmatprep.subr.bf16.mxu0 0
        %675 = vmatpush1.bf16.msra.mxu0 %v598
        %676 = vmatprep.subr.bf16.mxu0 0
        %677 = vmatpush1.bf16.msra.mxu0 %v599
        %678 = vmatprep.subr.bf16.mxu0 0
        %679 = vmatpush1.bf16.msra.mxu0 %v600
        %680 = vmatprep.subr.bf16.mxu0 0
        %681 = vmatpush1.bf16.msra.mxu0 %v601
        %682 = vmatprep.mubr.bf16.mxu0 %v395
        %683 = vmatmul.mubr.bf16.gmra.mrb[0].mxu0 %v394
        %v684 = vpop.f32.mrb[0].mxu0
        %v685 = vadd.f32 %v296, %v684
        %v686 = vpop.f32.mrb[0].mxu0
        %v687 = vpop.f32.mrb[0].mxu0
        %v688 = vadd.f32 %v296, %v687
        %v689 = vpop.f32.mrb[0].mxu0
        %690 = vmatprep.mubr.bf16.mxu0 %v399
        %691 = vmatmul.mubr.bf16.gmra.mrb[0].mxu0 %v398
        %v692 = vpop.f32.mrb[0].mxu0
        %v693 = vadd.f32 %v296, %v692
        %v694 = vpop.f32.mrb[0].mxu0
        %v695 = vpop.f32.mrb[0].mxu0
        %v696 = vadd.f32 %v296, %v695
        %v697 = vpop.f32.mrb[0].mxu0
        %698 = vmatprep.mubr.bf16.mxu0 %v403
        %699 = vmatmul.mubr.bf16.gmra.mrb[0].mxu0 %v402
        %v700 = vpop.f32.mrb[0].mxu0
        %v701 = vadd.f32 %v296, %v700
        %v702 = vpop.f32.mrb[0].mxu0
        %v703 = vpop.f32.mrb[0].mxu0
        %v704 = vadd.f32 %v296, %v703
        %v705 = vpop.f32.mrb[0].mxu0
        %706 = vmatprep.mubr.bf16.mxu0 %v407
        %707 = vmatmul.mubr.bf16.gmra.mrb[0].mxu0 %v406
        %v708 = vpop.f32.mrb[0].mxu0
        %v709 = vadd.f32 %v296, %v708
        %v710 = vpop.f32.mrb[0].mxu0
        %v711 = vpop.f32.mrb[0].mxu0
        %v712 = vadd.f32 %v296, %v711
        %v713 = vpop.f32.mrb[0].mxu0
        %714 = vmatprep.mubr.bf16.mxu0 %v411
        %715 = vmatmul.mubr.bf16.gmra.mrb[0].mxu0 %v410
        %v716 = vpop.f32.mrb[0].mxu0
        %v717 = vadd.f32 %v296, %v716
        %v718 = vpop.f32.mrb[0].mxu0
        %v719 = vpop.f32.mrb[0].mxu0
        %v720 = vadd.f32 %v296, %v719
        %v721 = vpop.f32.mrb[0].mxu0
        %722 = vmatprep.mubr.bf16.mxu0 %v415
        %723 = vmatmul.mubr.bf16.gmra.mrb[0].mxu0 %v414
        %v724 = vpop.f32.mrb[0].mxu0
        %v725 = vadd.f32 %v296, %v724
        %v726 = vpop.f32.mrb[0].mxu0
        %v727 = vpop.f32.mrb[0].mxu0
        %v728 = vadd.f32 %v296, %v727
        %v729 = vpop.f32.mrb[0].mxu0
        %730 = vmatprep.mubr.bf16.mxu0 %v419
        %731 = vmatmul.mubr.bf16.gmra.mrb[0].mxu0 %v418
        %v732 = vpop.f32.mrb[0].mxu0
        %v733 = vadd.f32 %v296, %v732
        %v734 = vpop.f32.mrb[0].mxu0
        %v735 = vpop.f32.mrb[0].mxu0
        %v736 = vadd.f32 %v296, %v735
        %v737 = vpop.f32.mrb[0].mxu0
        %738 = vmatprep.mubr.bf16.mxu0 %v423
        %739 = vmatmul.mubr.bf16.gmra.mrb[0].mxu0 %v422
        %v740 = vpop.f32.mrb[0].mxu0
        %v741 = vadd.f32 %v296, %v740
        %v742 = vpop.f32.mrb[0].mxu0
        %v743 = vpop.f32.mrb[0].mxu0
        %v744 = vadd.f32 %v296, %v743
        %v745 = vpop.f32.mrb[0].mxu0
        %746 = vdwg.mxu0
        %747 = vmatprep.subr.bf16.mxu0 0
        %748 = vmatpush1.bf16.msra.mxu0 %v602
        %749 = vmatprep.subr.bf16.mxu0 0
        %750 = vmatpush1.bf16.msra.mxu0 %v603
        %751 = vmatprep.subr.bf16.mxu0 0
        %752 = vmatpush1.bf16.msra.mxu0 %v604
        %753 = vmatprep.subr.bf16.mxu0 0
        %754 = vmatpush1.bf16.msra.mxu0 %v605
        %755 = vmatprep.subr.bf16.mxu0 0
        %756 = vmatpush1.bf16.msra.mxu0 %v606
        %757 = vmatprep.subr.bf16.mxu0 0
        %758 = vmatpush1.bf16.msra.mxu0 %v607
        %759 = vmatprep.subr.bf16.mxu0 0
        %760 = vmatpush1.bf16.msra.mxu0 %v608
        %761 = vmatprep.subr.bf16.mxu0 0
        %762 = vmatpush1.bf16.msra.mxu0 %v609
        %763 = vmatprep.subr.bf16.mxu0 0
        %764 = vmatpush1.bf16.msra.mxu0 %v610
        %765 = vmatprep.subr.bf16.mxu0 0
        %766 = vmatpush1.bf16.msra.mxu0 %v611
        %767 = vmatprep.subr.bf16.mxu0 0
        %768 = vmatpush1.bf16.msra.mxu0 %v612
        %769 = vmatprep.subr.bf16.mxu0 0
        %770 = vmatpush1.bf16.msra.mxu0 %v613
        %771 = vmatprep.subr.bf16.mxu0 0
        %772 = vmatpush1.bf16.msra.mxu0 %v614
        %773 = vmatprep.subr.bf16.mxu0 0
        %774 = vmatpush1.bf16.msra.mxu0 %v615
        %775 = vmatprep.subr.bf16.mxu0 0
        %776 = vmatpush1.bf16.msra.mxu0 %v616
        %777 = vmatprep.subr.bf16.mxu0 0
        %778 = vmatpush1.bf16.msra.mxu0 %v617
        %779 = vmatprep.mubr.bf16.mxu0 %v397
        %780 = vmatmul.mubr.bf16.gmra.mrb[0].mxu0 %v396
        %v781 = vpop.f32.mrb[0].mxu0
        %v782 = vadd.f32 %v685, %v781
        %v783 = vpop.f32.mrb[0].mxu0
        %v784 = vpop.f32.mrb[0].mxu0
        %v785 = vadd.f32 %v688, %v784
        %v786 = vpop.f32.mrb[0].mxu0
        %787 = vmatprep.mubr.bf16.mxu0 %v401
        %788 = vmatmul.mubr.bf16.gmra.mrb[0].mxu0 %v400
        %v789 = vpop.f32.mrb[0].mxu0
        %v790 = vadd.f32 %v693, %v789
        %v791 = vpop.f32.mrb[0].mxu0
        %v792 = vpop.f32.mrb[0].mxu0
        %v793 = vadd.f32 %v696, %v792
        %v794 = vpop.f32.mrb[0].mxu0
        %795 = vmatprep.mubr.bf16.mxu0 %v405
        %796 = vmatmul.mubr.bf16.gmra.mrb[0].mxu0 %v404
        %v797 = vpop.f32.mrb[0].mxu0
        %v798 = vadd.f32 %v701, %v797
        %v799 = vpop.f32.mrb[0].mxu0
        %v800 = vpop.f32.mrb[0].mxu0
        %v801 = vadd.f32 %v704, %v800
        %v802 = vpop.f32.mrb[0].mxu0
        %803 = vmatprep.mubr.bf16.mxu0 %v409
        %804 = vmatmul.mubr.bf16.gmra.mrb[0].mxu0 %v408
        %v805 = vpop.f32.mrb[0].mxu0
        %v806 = vadd.f32 %v709, %v805
        %v807 = vpop.f32.mrb[0].mxu0
        %v808 = vpop.f32.mrb[0].mxu0
        %v809 = vadd.f32 %v712, %v808
        %v810 = vpop.f32.mrb[0].mxu0
        %811 = vmatprep.mubr.bf16.mxu0 %v413
        %812 = vmatmul.mubr.bf16.gmra.mrb[0].mxu0 %v412
        %v813 = vpop.f32.mrb[0].mxu0
        %v814 = vadd.f32 %v717, %v813
        %v815 = vpop.f32.mrb[0].mxu0
        %v816 = vpop.f32.mrb[0].mxu0
        %v817 = vadd.f32 %v720, %v816
        %v818 = vpop.f32.mrb[0].mxu0
        %819 = vmatprep.mubr.bf16.mxu0 %v417
        %820 = vmatmul.mubr.bf16.gmra.mrb[0].mxu0 %v416
        %v821 = vpop.f32.mrb[0].mxu0
        %v822 = vadd.f32 %v725, %v821
        %v823 = vpop.f32.mrb[0].mxu0
        %v824 = vpop.f32.mrb[0].mxu0
        %v825 = vadd.f32 %v728, %v824
        %v826 = vpop.f32.mrb[0].mxu0
        %827 = vmatprep.mubr.bf16.mxu0 %v421
        %828 = vmatmul.mubr.bf16.gmra.mrb[0].mxu0 %v420
        %v829 = vpop.f32.mrb[0].mxu0
        %v830 = vadd.f32 %v733, %v829
        %v831 = vpop.f32.mrb[0].mxu0
        %v832 = vpop.f32.mrb[0].mxu0
        %v833 = vadd.f32 %v736, %v832
        %v834 = vpop.f32.mrb[0].mxu0
        %835 = vmatprep.mubr.bf16.mxu0 %v425
        %836 = vmatmul.mubr.bf16.gmra.mrb[0].mxu0 %v424
        %v837 = vpop.f32.mrb[0].mxu0
        %v838 = vadd.f32 %v741, %v837
        %v839 = vpop.f32.mrb[0].mxu0
        %v840 = vpop.f32.mrb[0].mxu0
        %v841 = vadd.f32 %v744, %v840
        %v842 = vpop.f32.mrb[0].mxu0
        %843 = vdwg.mxu0
        %vm844 = vcmask 523264
        %845 = vst.msk [vmem:[%s192] sm:$0xff] %vm844, %v782
        %846 = vst.msk [vmem:[%s192 + $0x8] sm:$0xff] %vm844, %v785
        %847 = vst.msk [vmem:[%s192 + $0x10] sm:$0xff] %vm844, %v790
        %848 = vst.msk [vmem:[%s192 + $0x18] sm:$0xff] %vm844, %v793
        %849 = vst.msk [vmem:[%s192 + $0x20] sm:$0xff] %vm844, %v798
        %850 = vst.msk [vmem:[%s192 + $0x28] sm:$0xff] %vm844, %v801
        %851 = vst.msk [vmem:[%s192 + $0x30] sm:$0xff] %vm844, %v806
        %852 = vst.msk [vmem:[%s192 + $0x38] sm:$0xff] %vm844, %v809
        %853 = vst.msk [vmem:[%s192 + $0x40] sm:$0xff] %vm844, %v814
        %854 = vst.msk [vmem:[%s192 + $0x48] sm:$0xff] %vm844, %v817
        %855 = vst.msk [vmem:[%s192 + $0x50] sm:$0xff] %vm844, %v822
        %856 = vst.msk [vmem:[%s192 + $0x58] sm:$0xff] %vm844, %v825
        %857 = vst.msk [vmem:[%s192 + $0x60] sm:$0xff] %vm844, %v830
        %858 = vst.msk [vmem:[%s192 + $0x68] sm:$0xff] %vm844, %v833
        %859 = vst.msk [vmem:[%s192 + $0x70] sm:$0xff] %vm844, %v838
        %860 = vst.msk [vmem:[%s192 + $0x78] sm:$0xff] %vm844, %v841
        %s861 = smul.u32 16, %s17
        %p862 = scmp.lt.s32.totalorder %s861, 31
        %s863 = scalar_select %p862, %s861, 31
        %s864 = smul.addr %s863, 8
        %s865 = scalar_lea.vmem %s3, %s864
        // Predicated region
        $region37: #{tpu_custom_call.1} parent=31 // pred_check
          %p866 = pneg %p103
        $region38: #{tpu_custom_call.1} parent=31 // pred_check_branch
          %868 = sbr.rel (%p866) target = $region40
        $region39: #{tpu_custom_call.1} parent=31 // pred_region
          %s869 = smul.u32 16, %s17
        $region40: #{tpu_custom_call.1} parent=31 // pred_fallthru
          _
      $region32: #{tpu_custom_call.1} parent=5 // pred_fallthru
        _
      %p870 = scmp.le.s32.totalorder 2, %s12
      // Predicated region
      $region41: #{tpu_custom_call.1} parent=5 // pred_check
        %p871 = pneg %p870
      $region42: #{tpu_custom_call.1} parent=5 // pred_check_branch
        %873 = sbr.rel (%p871) target = $region44
      $region43: #{tpu_custom_call.1} parent=5 // pred_region
        %s874 = ssub.s32 %s12, 2
        // Predicated region
        $region45: #{tpu_custom_call.1} parent=43 // pred_check
          %p875 = pneg %p109
        $region46: #{tpu_custom_call.1} parent=43 // pred_check_branch
          %877 = sbr.rel (%p875) target = $region48
        $region47: #{tpu_custom_call.1} parent=43 // pred_region
          %s878 = smul.u32 16, %s18
          %p879 = scmp.lt.s32.totalorder %s878, 31
          %s880 = scalar_select %p879, %s878, 31
          %s881 = smul.addr %s880, 8
          %s882 = scalar_lea.vmem %s3, %s881
        $region48: #{tpu_custom_call.1} parent=43 // pred_fallthru
          _
      $region44: #{tpu_custom_call.1} parent=5 // pred_fallthru
        _
    $region6: #{tpu_custom_call.1} parent=1 // loop_footer
      %s16 = sadd.s32 1, %s12
    $region7: #{tpu_custom_call.1} parent=1 // loop_footer_branch
      %11 = sbr.rel target = $region3
    $region8: #{tpu_custom_call.1} parent=1 // loop_exit
      _
    %883 = vsyncpa [#allocation3], 1
    %s884 = scalar_lea.sflag [#allocation3], 1
    %885 = vsyncpa %s884, 1

</llo_original>
